<compile_context>
chip_gen: v7x
topology: tpu7x:2x2x1
jax: 0.10.0
libtpu: 0.0.40
codegen_flags: <defaults>
</compile_context>

<pallas_src>
import functools
import math

import jax
import jax.numpy as jnp
from jax import lax
from jax.experimental import pallas as pl
from jax.experimental.pallas import tpu as pltpu

_LANES = 128
_BLOCK_ELEMS = 2048 * 128      # ~1 MiB f32 per input block (x2 inputs x2 buffers = 4 MiB)
_MAX_NATIVE_COLS = 32768       # beyond this, fall back to the (rows, 128) repack path


def _round_up(x, m):
    return ((x + m - 1) // m) * m


def _sublane_multiple(dtype):
    # Native packed tile: (8,128) f32, (16,128) bf16, (32,128) int8/fp8.
    return max(8, 32 // max(1, jnp.dtype(dtype).itemsize))


def _num_tensorcores():
    """TensorCores per chip (2 on v7x, 1 on v5e/v6e). Defensive: defaults to 1."""
    try:
        info = pltpu.get_tpu_info()
    except Exception:
        return 1
    for attr in ("num_cores", "tensorcores_per_chip", "num_tensorcores", "cores_per_chip"):
        v = getattr(info, attr, None)
        if isinstance(v, int) and v >= 1:
            return min(int(v), 4)
    return 1


def _mape_sum_kernel(o_ref, t_ref, sums_ref, *, ln_eps, total, tr, cols, steps):
    """Accumulate per-chunk partial sums of the MAPE error into sums_ref (1, 8, cols)."""
    c = pl.program_id(0)   # "parallel" chunk axis (v7x TC split)
    s = pl.program_id(1)   # "arbitrary" reduction axis (innermost)

    @pl.when(s == 0)
    def _():
        sums_ref[...] = jnp.zeros_like(sums_ref)

    o = o_ref[...].astype(jnp.float32)
    t = t_ref[...].astype(jnp.float32)

    # In-kernel tail masking: the grid may over-cover the array (partial last
    # block / tiny flatten pad / over-allocated chunk programs).  Zero the inputs
    # there *before* the exps so unspecified out-of-bounds data never contributes.
    block_idx = c * steps + s
    row0 = block_idx * tr
    row_ids = lax.broadcasted_iota(jnp.int32, (tr, cols), 0)
    col_ids = lax.broadcasted_iota(jnp.int32, (tr, cols), 1)
    gidx = (row0 + row_ids) * cols + col_ids
    valid = gidx < total
    o = jnp.where(valid, o, 0.0)
    t = jnp.where(valid, t, 0.0)

    # err = |exp(t) - exp(o)| / max(exp(t), eps) = |exp(t-m) - exp(o-m)|, m = max(t, ln eps).
    # Divide-free; exp(t-m) <= 1; no spurious f32 overflow when the reference is finite.
    # TODO(synk): on v7x with bf16 inputs this can turn EUP-bound; a per-block gate on the
    # (rare) t < ln(eps) branch would halve hot-path EUP work there.
    m = jnp.maximum(t, ln_eps)
    err = jnp.abs(jnp.exp(t - m) - jnp.exp(o - m))

    # Fold rows into an (8, cols) vreg-aligned partial with pure VPU adds; the full
    # cross-sublane/cross-lane reduction happens exactly once, in the wrapper.
    sums_ref[...] += err.reshape(tr // 8, 8, cols).sum(axis=0)[None]


def _as_rows_by_cols(x, sub):
    """Present x as 2-D (rows, cols) with cols % 128 == 0, avoiding relayout copies
    whenever possible."""
    if x.ndim >= 2 and x.shape[-1] % _LANES == 0 and x.shape[-1] <= _MAX_NATIVE_COLS:
        # Collapsing leading (major) dims is layout-preserving: no copy, no pad.
        return x.reshape(-1, x.shape[-1])
    # Ragged fallback: flatten and pad up to one packed tile of elements
    # (<= sub*128 - 1 extras).  A copy is unavoidable here anyway (relayout).
    flat = x.reshape(-1)
    padded = _round_up(max(flat.size, 1), sub * _LANES)
    if padded != flat.size:
        flat = jnp.pad(flat, (0, padded - flat.size))
    return flat.reshape(-1, _LANES)


def mape_loss(outputs, targets, *, epsilon=1e-6, block_elems=_BLOCK_ELEMS, num_chunks=None):
    """Pallas MAPE loss. outputs/targets: same shape, any rank/float dtype; returns scalar f32."""
    assert outputs.shape == targets.shape, "outputs/targets shape mismatch"
    total = outputs.size
    assert 0 < total < 2**31, "element count must fit int32 indexing"

    sub = max(_sublane_multiple(outputs.dtype), _sublane_multiple(targets.dtype))
    x_o = _as_rows_by_cols(outputs, sub)
    x_t = _as_rows_by_cols(targets, sub)
    rows, cols = x_o.shape

    # Rows per block: multiple of the packed sublane tile, ~block_elems elements.
    tr = max(sub, (block_elems // cols) // sub * sub)
    tr = min(tr, _round_up(rows, sub))

    blocks_total = -(-rows // tr)
    if num_chunks is None:
        num_chunks = _num_tensorcores()
    num_chunks = max(1, min(int(num_chunks), blocks_total))
    steps = -(-blocks_total // num_chunks)

    kernel = functools.partial(
        _mape_sum_kernel,
        ln_eps=float(math.log(epsilon)),
        total=int(total), tr=int(tr), cols=int(cols), steps=int(steps),
    )

    # Clamp the block index so over-covering programs never start past the array;
    # their contribution is zeroed by the in-kernel mask.
    def in_map(c, s):
        return (jnp.minimum(c * steps + s, blocks_total - 1), 0)

    in_spec = pl.BlockSpec((tr, cols), in_map)

    bytes_in = int(x_o.size * jnp.dtype(x_o.dtype).itemsize
                   + x_t.size * jnp.dtype(x_t.dtype).itemsize)
    cost = pl.CostEstimate(
        flops=int(10 * total),
        transcendentals=int(2 * total),
        bytes_accessed=bytes_in + int(num_chunks * 8 * cols * 4),
    )

    sums = pl.pallas_call(
        kernel,
        out_shape=jax.ShapeDtypeStruct((num_chunks, 8, cols), jnp.float32),
        grid_spec=pltpu.PrefetchScalarGridSpec(
            num_scalar_prefetch=0,
            grid=(num_chunks, steps),
            in_specs=[in_spec, in_spec],
            out_specs=pl.BlockSpec((1, 8, cols), lambda c, s: (c, 0, 0)),
        ),
        compiler_params=pltpu.CompilerParams(
            dimension_semantics=("parallel", "arbitrary"),
        ),
        cost_estimate=cost,
    )(x_o, x_t)

    # Tiny final reduction over the (num_chunks, 8, cols) partials + mean/scale.
    return jnp.sum(sums) * (100.0 / total)


def mape_loss_ref(outputs, targets, epsilon=1e-6):
    o = jnp.exp(outputs.astype(jnp.float32))
    t = jnp.exp(targets.astype(jnp.float32))
    denom = jnp.maximum(jnp.abs(t), jnp.float32(epsilon))
    return jnp.mean(jnp.abs((t - o) / denom)) * 100.0


if __name__ == "__main__":
    key = jax.random.PRNGKey(0)
    k1, k2, k3, k4 = jax.random.split(key, 4)

    # Stock-transformer regression head: log-space predictions (batch, seq).
    outputs = jax.random.normal(k1, (4, 128), dtype=jnp.float32) * 0.5
    targets = jax.random.normal(k2, (4, 128), dtype=jnp.float32) * 0.5
    loss = jax.block_until_ready(mape_loss(outputs, targets))
    ref = mape_loss_ref(outputs, targets)
    assert jnp.allclose(loss, ref, rtol=1e-4, atol=1e-3), (loss, ref)

    # Ragged shape exercises the flatten + in-kernel tail-mask path (no big pad).
    outputs2 = jax.random.normal(k3, (7, 33), dtype=jnp.float32) * 0.5
    targets2 = jax.random.normal(k4, (7, 33), dtype=jnp.float32) * 0.5
    loss2 = jax.block_until_ready(mape_loss(outputs2, targets2))
    ref2 = mape_loss_ref(outputs2, targets2)
    assert jnp.allclose(loss2, ref2, rtol=1e-4, atol=1e-3), (loss2, ref2)

    # Multi-step + partial-last-block + 2-chunk (clamped index map) path.
    outputs3 = jax.random.normal(k1, (20, 128), dtype=jnp.float32) * 0.5
    targets3 = jax.random.normal(k2, (20, 128), dtype=jnp.float32) * 0.5
    loss3 = jax.block_until_ready(
        mape_loss(outputs3, targets3, block_elems=8 * 128, num_chunks=2))
    ref3 = mape_loss_ref(outputs3, targets3)
    assert jnp.allclose(loss3, ref3, rtol=1e-4, atol=1e-3), (loss3, ref3)

    print("KERNEL_OK")
</pallas_src>

<mosaic_0001>
module attributes {stable_mosaic.version = 11 : i64} {
  func.func @_mape_sum_kernel(%arg0: i32, %arg1: i32, %arg2: memref<8x128xf32, #tpu.memory_space<vmem>>, %arg3: memref<8x128xf32, #tpu.memory_space<vmem>>, %arg4: memref<1x8x128xf32, #tpu.memory_space<vmem>>) attributes {dimension_semantics = [#tpu.dimension_semantics<parallel>, #tpu.dimension_semantics<arbitrary>], iteration_bounds = array<i64: 1, 1>, scalar_prefetch = 0 : i64, scratch_operands = 0 : i64, tpu.core_type = #tpu.core_type<tc>, window_params = [{transform_indices = @transform_0, window_bounds = array<i64: 8, 128>}, {transform_indices = @transform_1, window_bounds = array<i64: 8, 128>}, {transform_indices = @transform_2, window_bounds = array<i64: 1, 8, 128>}]} {
    %c0_i32 = arith.constant 0 : i32
    %0 = arith.cmpi eq, %arg1, %c0_i32 : i32
    %1 = arith.extui %0 : i1 to i32
    %c0_i32_0 = arith.constant 0 : i32
    %2 = arith.cmpi ne, %1, %c0_i32_0 : i32
    scf.if %2 {
      %cst_13 = arith.constant 0.000000e+00 : f32
      %35 = vector.broadcast %cst_13 : f32 to vector<1x8x128xf32>
      %c0_14 = arith.constant 0 : index
      %c0_15 = arith.constant 0 : index
      %c0_16 = arith.constant 0 : index
      %36 = vector.load %arg4[%c0_14, %c0_15, %c0_16] : memref<1x8x128xf32, #tpu.memory_space<vmem>>, vector<1x8x128xf32>
      tpu.vector_store %arg4[%c0_14, %c0_15, %c0_16], %35 {strides = array<i32>} : memref<1x8x128xf32, #tpu.memory_space<vmem>>, vector<1x8x128xf32>,
    } else {
    }
    %c0 = arith.constant 0 : index
    %c0_1 = arith.constant 0 : index
    %3 = vector.load %arg2[%c0, %c0_1] : memref<8x128xf32, #tpu.memory_space<vmem>>, vector<8x128xf32>
    %c0_2 = arith.constant 0 : index
    %c0_3 = arith.constant 0 : index
    %4 = vector.load %arg3[%c0_2, %c0_3] : memref<8x128xf32, #tpu.memory_space<vmem>>, vector<8x128xf32>
    %c1_i32 = arith.constant 1 : i32
    %5 = arith.muli %arg0, %c1_i32 : i32
    %6 = arith.addi %5, %arg1 : i32
    %c8_i32 = arith.constant 8 : i32
    %7 = arith.muli %6, %c8_i32 : i32
    %8 = tpu.iota {dimensions = array<i32: 0>} : vector<8x128xi32>
    %9 = tpu.iota {dimensions = array<i32: 1>} : vector<8x128xi32>
    %10 = vector.broadcast %7 : i32 to vector<8x128xi32>
    %11 = arith.addi %10, %8 : vector<8x128xi32>
    %c128_i32 = arith.constant 128 : i32
    %12 = vector.broadcast %c128_i32 : i32 to vector<8x128xi32>
    %13 = arith.muli %11, %12 : vector<8x128xi32>
    %14 = arith.addi %13, %9 : vector<8x128xi32>
    %c512_i32 = arith.constant 512 : i32
    %15 = vector.broadcast %c512_i32 : i32 to vector<8x128xi32>
    %16 = arith.cmpi slt, %14, %15 : vector<8x128xi32>
    %cst = arith.constant 0.000000e+00 : f32
    %17 = vector.broadcast %cst : f32 to vector<8x128xf32>
    %18 = arith.select %16, %3, %17 : vector<8x128xi1>, vector<8x128xf32>
    %cst_4 = arith.constant 0.000000e+00 : f32
    %19 = vector.broadcast %cst_4 : f32 to vector<8x128xf32>
    %20 = arith.select %16, %4, %19 : vector<8x128xi1>, vector<8x128xf32>
    %cst_5 = arith.constant -13.8155107 : f32
    %21 = vector.broadcast %cst_5 : f32 to vector<8x128xf32>
    %22 = arith.maximumf %20, %21 : vector<8x128xf32>
    %23 = arith.subf %20, %22 : vector<8x128xf32>
    %24 = math.exp %23 : vector<8x128xf32>
    %25 = arith.subf %18, %22 : vector<8x128xf32>
    %26 = math.exp %25 : vector<8x128xf32>
    %27 = arith.subf %24, %26 : vector<8x128xf32>
    %28 = math.absf %27 : vector<8x128xf32>
    %c0_6 = arith.constant 0 : index
    %c0_7 = arith.constant 0 : index
    %c0_8 = arith.constant 0 : index
    %29 = vector.load %arg4[%c0_6, %c0_7, %c0_8] : memref<1x8x128xf32, #tpu.memory_space<vmem>>, vector<1x8x128xf32>
    %30 = vector.shape_cast %28 : vector<8x128xf32> to vector<1x8x128xf32>
    %cst_9 = arith.constant dense<0.000000e+00> : vector<8x128xf32>
    %31 = vector.multi_reduction <add>, %30, %cst_9 [0] : vector<1x8x128xf32> to vector<8x128xf32>
    %32 = vector.shape_cast %31 : vector<8x128xf32> to vector<1x8x128xf32>
    %33 = arith.addf %29, %32 : vector<1x8x128xf32>
    %c0_10 = arith.constant 0 : index
    %c0_11 = arith.constant 0 : index
    %c0_12 = arith.constant 0 : index
    %34 = vector.load %arg4[%c0_10, %c0_11, %c0_12] : memref<1x8x128xf32, #tpu.memory_space<vmem>>, vector<1x8x128xf32>
    tpu.vector_store %arg4[%c0_10, %c0_11, %c0_12], %33 {strides = array<i32>} : memref<1x8x128xf32, #tpu.memory_space<vmem>>, vector<1x8x128xf32>,
    return
  }
  func.func @transform_0(%arg0: i32, %arg1: i32) -> (i32, i32) {
    %c1_i32 = arith.constant 1 : i32
    %0 = arith.muli %arg0, %c1_i32 : i32
    %1 = arith.addi %0, %arg1 : i32
    %c0_i32 = arith.constant 0 : i32
    %2 = arith.minsi %1, %c0_i32 : i32
    %c0_i32_0 = arith.constant 0 : i32
    %c0_i32_1 = arith.constant 0 : i32
    return %2, %c0_i32_0 : i32, i32
  }
  func.func @transform_1(%arg0: i32, %arg1: i32) -> (i32, i32) {
    %c1_i32 = arith.constant 1 : i32
    %0 = arith.muli %arg0, %c1_i32 : i32
    %1 = arith.addi %0, %arg1 : i32
    %c0_i32 = arith.constant 0 : i32
    %2 = arith.minsi %1, %c0_i32 : i32
    %c0_i32_0 = arith.constant 0 : i32
    %c0_i32_1 = arith.constant 0 : i32
    return %2, %c0_i32_0 : i32, i32
  }
  func.func @transform_2(%arg0: i32, %arg1: i32) -> (i32, i32, i32) {
    %c0_i32 = arith.constant 0 : i32
    %c0_i32_0 = arith.constant 0 : i32
    %c0_i32_1 = arith.constant 0 : i32
    return %arg0, %c0_i32, %c0_i32_0 : i32, i32, i32
  }
}

</mosaic_0001>

<llo_original>
// kernel: tpu_custom_call.1
$region0: #{tpu_custom_call.1}
  #allocation0 [shape = 'u32[]', space=smem, size = 0x4, offset = 0x4, fixed_abs, tag = 'smem constant byte address 0x4 - core index']
  #allocation1 [shape = 'u32[144,128]{1,0:T(1,128)}', space=vmem, size = 0x12000, scoped, tag = 'internal scratch']
  %s0 = inlined_call_operand.hbm [shape: f32[4,128], index: 0, kind: input, shape index: {}]
  %s1 = inlined_call_operand.hbm [shape: f32[4,128], index: 1, kind: input, shape index: {}]
  %s2 = inlined_call_operand.hbm [shape: f32[1,8,128], index: 2, kind: output, shape index: {}]
  %s3 = sld [smem:[#allocation0]]
  $region30: #{tpu_custom_call.1} parent=0
    _
  %s5 = ssub.s32 1, %s3
  %s6 = scalar_select 0, %s5, %s3
  $region1: #{tpu_custom_call.1} parent=0
    #allocation2 [shape = 'u8[4096]{0}', space=vmem, size = 0x1000, scoped, tag = 'input window, operand 0, single buffered']
    #allocation3 [shape = 's32[1]{0}', space=sflag, size = 0x4, scoped, tag = 'scoped memory for tpu_custom_call.1']
    #allocation4 [shape = 's32[1]{0}', space=sflag, size = 0x4, scoped, tag = 'scoped memory for tpu_custom_call.1']
    #allocation5 [shape = 'u8[4096]{0}', space=vmem, size = 0x1000, scoped, tag = 'input window, operand 1, single buffered']
    #allocation6 [shape = 's32[1]{0}', space=sflag, size = 0x4, scoped, tag = 'scoped memory for tpu_custom_call.1']
    #allocation7 [shape = 'u8[4096]{0}', space=vmem, size = 0x1000, scoped, tag = 'output window, operand 0, single buffered']
    %7 = vsyncpa [#allocation3], 0
    %8 = vsyncpa [#allocation6], 0
    %9 = vsyncpa [#allocation4], 0
    // Predicated region
    $region2: #{tpu_custom_call.1} parent=1 // pred_check
      _
    $region3: #{tpu_custom_call.1} parent=1 // pred_check_branch
      %11 = sbr.rel (0) target = $region5
    $region4: #{tpu_custom_call.1} parent=1 // pred_region
      %s12 = sadd.s32 0, 0
      %p13 = scmp.lt.s32.totalorder %s12, 0
      %s14 = scalar_select %p13, %s12, 0
      %s15 = smul.u32 2, %s14
      %s16 = ssub.s32 1, %s15
      %s17 = smul.u32 64, %s16
      %s19 = ssub.s32 128, %s17
      %20 = vsyncadd [#allocation3], %s19
      %p21 = scmp.ne.s32.totalorder 0, %s17
      %s22 = smul.addr %s15, 64
      %s23 = scalar_lea.hbm %s0, %s22
      %s24 = smul.u32 4, %s16
      %s25 = sshll.u32 [#allocation2], 4
      %s26 = int_to_ptr.vmem [resolvable:$true] %s25
      %s27 = sshll.u32 %s24, 4
      %31 = dma.hbm_to_vmem [thread:$0]  (%p21), %s23, %s27, %s26, [#allocation3], 64, 64, 4
    $region5: #{tpu_custom_call.1} parent=1 // pred_fallthru
      _
    // Predicated region
    $region6: #{tpu_custom_call.1} parent=1 // pred_check
      _
    $region7: #{tpu_custom_call.1} parent=1 // pred_check_branch
      %33 = sbr.rel (0) target = $region9
    $region8: #{tpu_custom_call.1} parent=1 // pred_region
      %s34 = sadd.s32 0, 0
      %p35 = scmp.lt.s32.totalorder %s34, 0
      %s36 = scalar_select %p35, %s34, 0
      %s37 = smul.u32 2, %s36
      %s38 = ssub.s32 1, %s37
      %s39 = smul.u32 64, %s38
      %s41 = ssub.s32 128, %s39
      %42 = vsyncadd [#allocation6], %s41
      %p43 = scmp.ne.s32.totalorder 0, %s39
      %s44 = smul.addr %s37, 64
      %s45 = scalar_lea.hbm %s1, %s44
      %s46 = smul.u32 4, %s38
      %s47 = sshll.u32 [#allocation5], 4
      %s48 = int_to_ptr.vmem [resolvable:$true] %s47
      %s49 = sshll.u32 %s46, 4
      %53 = dma.hbm_to_vmem [thread:$0]  (%p43), %s45, %s49, %s48, [#allocation6], 64, 64, 4
    $region9: #{tpu_custom_call.1} parent=1 // pred_fallthru
      _
    // Predicated region
    $region10: #{tpu_custom_call.1} parent=1 // pred_check
      _
    $region11: #{tpu_custom_call.1} parent=1 // pred_check_branch
      %55 = sbr.rel (0) target = $region13
    $region12: #{tpu_custom_call.1} parent=1 // pred_region
      %56 = dma.done [#allocation3], 128
    $region13: #{tpu_custom_call.1} parent=1 // pred_fallthru
      _
    // Predicated region
    $region14: #{tpu_custom_call.1} parent=1 // pred_check
      _
    $region15: #{tpu_custom_call.1} parent=1 // pred_check_branch
      %58 = sbr.rel (0) target = $region17
    $region16: #{tpu_custom_call.1} parent=1 // pred_region
      %59 = dma.done [#allocation6], 128
    $region17: #{tpu_custom_call.1} parent=1 // pred_fallthru
      _
    %s60 = sadd.s32 0, 0
    %p61 = scmp.lt.s32.totalorder %s60, 0
    %s62 = scalar_select %p61, %s60, 0
    %s63 = smul.u32 2, %s62
    %s64 = ssub.s32 1, %s63
    %s65 = smul.u32 64, %s64
    %s66 = sadd.s32 0, 0
    %p67 = scmp.lt.s32.totalorder %s66, 0
    %s68 = scalar_select %p67, %s66, 0
    %s69 = smul.u32 2, %s68
    %s70 = ssub.s32 1, %s69
    %s71 = smul.u32 64, %s70
    %p72 = scmp.eq.s32.totalorder 0, 0
    // Predicated region
    $region18: #{tpu_custom_call.1} parent=1 // pred_check
      %p73 = pneg %p72
    $region19: #{tpu_custom_call.1} parent=1 // pred_check_branch
      %75 = sbr.rel (%p73) target = $region21
    $region20: #{tpu_custom_call.1} parent=1 // pred_region
      %76 = vst [vmem:[#allocation7] sm:$0xff] 0.0
    $region21: #{tpu_custom_call.1} parent=1 // pred_fallthru
      _
    %v77 = vld [vmem:[#allocation2] sm:$0xff]
    %v78 = vld [vmem:[#allocation5] sm:$0xff]
    %s79 = sadd.s32 0, 0
    %s80 = smul.u32 %s79, 8
    %v81 = vlaneseq
    %v82 = vshrl.u32 %v81, 7
    %v83 = vlaneseq
    %v84 = vand.u32 %v83, 127
    %v85 = vstv %s80
    %v86 = vadd.s32 %v85, %v82
    %v87 = vmul.u32 %v86, 128
    %v88 = vadd.s32 %v87, %v84
    %vm89 = vcmp.lt.s32.totalorder %v88, 512
    %v90 = vsel %vm89, %v77, 0.0
    %v91 = vsel %vm89, %v78, 0.0
    %v92 = vmax.f32 %v91, -13.815511
    %v93 = vsub.f32 %v91, %v92
    %v94 = vmul.f32 %v93, 1.442695
    %v95 = vpow.pop %v94
    %v96 = vsub.f32 %v90, %v92
    %v97 = vmul.f32 %v96, 1.442695
    %v98 = vpow.pop %v97
    %v99 = vsub.f32 %v95, %v98
    %v100 = vand.u32 2147483647, %v99
    %v101 = vld [vmem:[#allocation7] sm:$0xff]
    %v102 = vadd.f32 %v100, 0.0
    %v103 = vadd.f32 %v101, %v102
    %104 = vst [vmem:[#allocation7] sm:$0xff] %v103
    // Predicated region
    $region22: #{tpu_custom_call.1} parent=1 // pred_check
      _
    $region23: #{tpu_custom_call.1} parent=1 // pred_check_branch
      %106 = sbr.rel (0) target = $region25
    $region24: #{tpu_custom_call.1} parent=1 // pred_region
      %s108 = ssub.s32 128, 128
      %109 = vsyncadd [#allocation4], %s108
      %s111 = sshll.u32 [#allocation7], 4
      %s112 = int_to_ptr.vmem [resolvable:$true] %s111
      %114 = dma.vmem_to_hbm [thread:$0]  %s112, 128, %s2, [#allocation4]
    $region25: #{tpu_custom_call.1} parent=1 // pred_fallthru
      _
    // Predicated region
    $region26: #{tpu_custom_call.1} parent=1 // pred_check
      _
    $region27: #{tpu_custom_call.1} parent=1 // pred_check_branch
      %116 = sbr.rel (0) target = $region29
    $region28: #{tpu_custom_call.1} parent=1 // pred_region
      %117 = dma.done [#allocation4], 128
    $region29: #{tpu_custom_call.1} parent=1 // pred_fallthru
      _
    %118 = vsyncpa [#allocation3], 1
    %119 = vsyncpa [#allocation6], 1
    %120 = vsyncpa [#allocation4], 1

</llo_original>
